<compile_context>
chip_gen: v6e
topology: v6e:2x2x1
jax: 0.10.0
libtpu: 0.0.40
codegen_flags: <defaults>
</compile_context>

<pallas_src>
import functools

import jax
import jax.numpy as jnp
from jax import lax
from jax.experimental import pallas as pl
from jax.experimental.pallas import tpu as pltpu


_VMEM_LIMIT = 48 * 1024 * 1024   # leaves headroom under v7x's 64 MiB VMEM
_CONV_ROW_TILE = 8               # output rows per conv3x3 tile (demo-sized)
_UP_ROW_TILE = 4                 # input rows per upconv tile (demo-sized)


# ---------------------------------------------------------------------------
# tile-size helpers
# ---------------------------------------------------------------------------

def _pick_row_tile(n, target, quantum):
    """Row tile for conv3x3: n itself if small, else a multiple of `quantum`."""
    if n <= target:
        return n
    return max((target // quantum) * quantum, quantum)


def _pick_exact_tile(n, target, quantum):
    """Largest t <= target with t % quantum == 0 and t | n; falls back to n."""
    t = (min(n, target) // quantum) * quantum
    while t >= quantum:
        if n % t == 0:
            return t
        t -= quantum
    return n


# ---------------------------------------------------------------------------
# Pallas kernels
# ---------------------------------------------------------------------------

def _conv3x3_kernel(*refs, n_in, TR, Wo, relu):
    """Valid 3x3 conv over the (virtual) channel-concat of `n_in` inputs.

    refs = (x_0..x_{n-1}, w_0..w_{n-1}, bias, out, acc_scratch)
      x_i  : (1, Hp, W, Cin_i) f32  -- full (row-padded) image, resident/batch
      w_i  : (3, 3, Cin_i, Cout) bf16 -- grid-invariant, stays resident in VMEM
      bias : (1, Cout) f32
      out  : (1, TR, Wo*Cout) f32   -- lane-dense row tile
      acc  : (TR*Wo, Cout) f32 VMEM scratch accumulator
    """
    x_refs = refs[:n_in]
    w_refs = refs[n_in:2 * n_in]
    b_ref = refs[2 * n_in]
    o_ref = refs[2 * n_in + 1]
    acc_ref = refs[2 * n_in + 2]

    row0 = pl.multiple_of(pl.program_id(1) * TR, TR)
    acc_ref[...] = jnp.zeros_like(acc_ref)

    # 9 * n_in MXU matmuls: bf16 operands, f32 accumulation in VMEM scratch.
    for x_ref, w_ref in zip(x_refs, w_refs):
        cin = x_ref.shape[-1]
        for kh in range(3):
            rows = x_ref[0, pl.ds(row0 + kh, TR), :, :].astype(jnp.bfloat16)
            for kw in range(3):
                # TODO(synk): the kw shift is a sublane relayout; it could be
                # realized on the XLU with pltpu.roll instead.
                patch = rows[:, kw:kw + Wo, :].reshape(TR * Wo, cin)
                acc_ref[...] += jnp.dot(patch, w_ref[kh, kw],
                                        preferred_element_type=jnp.float32)

    out = acc_ref[...] + b_ref[...]
    if relu:
        out = jnp.maximum(out, 0.0)
    o_ref[0] = out.reshape(TR, -1).astype(o_ref.dtype)


def _upconv2x2_kernel(x_ref, w_ref, b_ref, o_ref, *, TRu, W):
    """ConvTranspose2d(kernel=2, stride=2) on a row tile.

    The result is emitted directly in stride-2 interleaved layout:
      out[2h+kh, (2w+kw)*Cout + c] = x[h, w, :] @ W[kh, kw, :, c] + b[c]
    so the wrapper's (B, 2H, 2W*Cout) -> (B, 2H, 2W, Cout) reshape is free.
    """
    Cin = x_ref.shape[-1]
    Cout = w_ref.shape[-1]
    x = x_ref[0].reshape(TRu * W, Cin).astype(jnp.bfloat16)
    b = b_ref[...]

    planes = []
    for kh in range(2):
        parts = []
        for kw in range(2):
            p = jnp.dot(x, w_ref[kh, kw],
                        preferred_element_type=jnp.float32) + b
            parts.append(p.reshape(TRu, W, Cout))
        # (kw, c) interleave along the lane axis.
        planes.append(jnp.concatenate(parts, axis=-1).reshape(TRu, 2 * W * Cout))
    # kh row interleave: (TRu, 2, M) -> (2*TRu, M) is a plain row-major merge.
    out = jnp.stack(planes, axis=1).reshape(2 * TRu, 2 * W * Cout)
    o_ref[0] = out.astype(o_ref.dtype)


# ---------------------------------------------------------------------------
# Wrappers (pallas_call setup)
# ---------------------------------------------------------------------------

def conv3x3_fused(xs, ws, b, *, relu=True, row_tile=_CONV_ROW_TILE):
    """Valid 3x3 conv of concat(xs, axis=-1) using the Cin-split weights `ws`,
    with fused bias (+ReLU).  xs[i]: (B, H, W, Cin_i) f32; ws[i]: (3,3,Cin_i,Cout).
    """
    B, H, W, _ = xs[0].shape
    Cout = int(ws[0].shape[-1])
    Ho, Wo = H - 2, W - 2

    TR = _pick_row_tile(Ho, row_tile, 8)
    nt = -(-Ho // TR)
    Ho_pad = nt * TR
    Hp = Ho_pad + 2
    if Hp != H:
        # Ragged row tiling: pad input rows so every tile's 3-row halo read is
        # in bounds; the padded output rows are sliced off below.
        xs = [jnp.pad(x, ((0, 0), (0, Hp - H), (0, 0), (0, 0))) for x in xs]

    n_in = len(xs)
    cins = [int(x.shape[-1]) for x in xs]
    ws = [w.astype(jnp.bfloat16) for w in ws]
    b2 = b.reshape(1, Cout).astype(jnp.float32)

    in_specs = (
        [pl.BlockSpec((1, Hp, W, c), lambda bi, r: (bi, 0, 0, 0)) for c in cins]
        + [pl.BlockSpec((3, 3, c, Cout), lambda bi, r: (0, 0, 0, 0)) for c in cins]
        + [pl.BlockSpec((1, Cout), lambda bi, r: (0, 0))]
    )

    flops = 2 * B * Ho * Wo * 9 * sum(cins) * Cout
    bytes_accessed = (sum(B * Hp * W * c * 4 for c in cins)
                      + sum(9 * c * Cout * 2 for c in cins)
                      + Cout * 4 + B * Ho_pad * Wo * Cout * 4)

    kern = functools.partial(_conv3x3_kernel, n_in=n_in, TR=TR, Wo=Wo, relu=relu)
    out = pl.pallas_call(
        kern,
        out_shape=jax.ShapeDtypeStruct((B, Ho_pad, Wo * Cout), jnp.float32),
        grid=(B, nt),
        in_specs=in_specs,
        out_specs=pl.BlockSpec((1, TR, Wo * Cout), lambda bi, r: (bi, r, 0)),
        scratch_shapes=[pltpu.VMEM((TR * Wo, Cout), jnp.float32)],
        compiler_params=pltpu.CompilerParams(
            dimension_semantics=("parallel", "parallel"),
            vmem_limit_bytes=_VMEM_LIMIT),
        cost_estimate=pl.CostEstimate(flops=int(flops), transcendentals=0,
                                      bytes_accessed=int(bytes_accessed)),
    )(*xs, *ws, b2)

    if Ho_pad != Ho:
        out = out[:, :Ho]
    return out.reshape(B, Ho, Wo, Cout)


def conv_transpose2x2(x, w, b, *, row_tile=_UP_ROW_TILE):
    """ConvTranspose2d(Cin, Cout, kernel=2, stride=2).  x: (B,H,W,Cin) f32."""
    B, H, W, Cin = x.shape
    Cout = int(w.shape[-1])
    TRu = _pick_exact_tile(H, row_tile, 4)    # output block rows = 2*TRu
    nt = H // TRu

    wb = w.astype(jnp.bfloat16)
    b2 = b.reshape(1, Cout).astype(jnp.float32)

    flops = 2 * B * H * W * Cin * Cout * 4
    bytes_accessed = (B * H * W * Cin * 4 + 4 * Cin * Cout * 2 + Cout * 4
                      + B * 2 * H * 2 * W * Cout * 4)

    kern = functools.partial(_upconv2x2_kernel, TRu=TRu, W=W)
    out = pl.pallas_call(
        kern,
        out_shape=jax.ShapeDtypeStruct((B, 2 * H, 2 * W * Cout), jnp.float32),
        grid=(B, nt),
        in_specs=[
            pl.BlockSpec((1, TRu, W, Cin), lambda bi, r: (bi, r, 0, 0)),
            pl.BlockSpec((2, 2, Cin, Cout), lambda bi, r: (0, 0, 0, 0)),
            pl.BlockSpec((1, Cout), lambda bi, r: (0, 0)),
        ],
        out_specs=pl.BlockSpec((1, 2 * TRu, 2 * W * Cout),
                               lambda bi, r: (bi, r, 0)),
        compiler_params=pltpu.CompilerParams(
            dimension_semantics=("parallel", "parallel"),
            vmem_limit_bytes=_VMEM_LIMIT),
        cost_estimate=pl.CostEstimate(flops=int(flops), transcendentals=0,
                                      bytes_accessed=int(bytes_accessed)),
    )(x, wb, b2)
    # (B, 2H, 2W*Cout) -> (B, 2H, 2W, Cout): data is already interleaved, free.
    return out.reshape(B, 2 * H, 2 * W, Cout)


# ---------------------------------------------------------------------------
# Decoder forward (matches torch module semantics, NHWC)
# ---------------------------------------------------------------------------

def crop(enc, x):
    """Center-crop `enc` spatially to `x` (torch trunc-toward-zero cast)."""
    H, W = x.shape[1], x.shape[2]
    top = int((enc.shape[1] - H) / 2)
    left = int((enc.shape[2] - W) / 2)
    return enc[:, top:top + H, left:left + W, :]


def decoder_forward(x, encoder_features, params):
    for i, p in enumerate(params):
        x = conv_transpose2x2(x, p["up_w"], p["up_b"])       # ConvTranspose2d(2,2)
        enc = crop(encoder_features[i], x)                   # center crop
        c_up = x.shape[-1]
        # Fused skip-connection concat: split conv1's weight along Cin and pass
        # the upsampled activation and the cropped encoder feature separately.
        x = conv3x3_fused([x, enc],
                          [p["c1_w"][:, :, :c_up, :], p["c1_w"][:, :, c_up:, :]],
                          p["c1_b"], relu=True)              # Block.conv1 + ReLU
        x = conv3x3_fused([x], [p["c2_w"]], p["c2_b"], relu=True)  # conv2 + ReLU
    return x


# ---------------------------------------------------------------------------
# Pure-JAX reference (same bf16-operand / f32-accumulate math)
# ---------------------------------------------------------------------------

def _ref_conv3x3(x, w, b, relu=True):
    y = lax.conv_general_dilated(
        x.astype(jnp.bfloat16), w.astype(jnp.bfloat16),
        window_strides=(1, 1), padding="VALID",
        dimension_numbers=("NHWC", "HWIO", "NHWC"),
        preferred_element_type=jnp.float32) + b
    return jnp.maximum(y, 0.0) if relu else y


def _ref_conv_transpose2x2(x, w, b):
    B, H, W, _ = x.shape
    Cout = w.shape[-1]
    xb, wb = x.astype(jnp.bfloat16), w.astype(jnp.bfloat16)
    y = jnp.zeros((B, 2 * H, 2 * W, Cout), jnp.float32)
    for kh in range(2):
        for kw in range(2):
            p = jnp.einsum("bhwi,io->bhwo", xb, wb[kh, kw],
                           preferred_element_type=jnp.float32) + b
            y = y.at[:, kh::2, kw::2, :].set(p)
    return y


def decoder_forward_ref(x, encoder_features, params):
    for i, p in enumerate(params):
        x = _ref_conv_transpose2x2(x, p["up_w"], p["up_b"])
        enc = crop(encoder_features[i], x)
        x = jnp.concatenate([x, enc], axis=-1)
        x = _ref_conv3x3(x, p["c1_w"], p["c1_b"])
        x = _ref_conv3x3(x, p["c2_w"], p["c2_b"])
    return x


# ---------------------------------------------------------------------------
# Deterministic parameter init + demo
# ---------------------------------------------------------------------------

def init_decoder_params(key, chs):
    params = []
    for i in range(len(chs) - 1):
        cin, cout = chs[i], chs[i + 1]
        k = jax.random.fold_in(key, i)
        k_up, k_c1, k_c2 = jax.random.split(k, 3)
        params.append({
            # ConvTranspose2d(cin, cout, 2, 2): weight (2,2,cin,cout), bias (cout,)
            "up_w": 0.1 * jax.random.normal(k_up, (2, 2, cin, cout), jnp.float32),
            "up_b": 0.01 * jnp.arange(cout, dtype=jnp.float32),
            # Block.conv1 = Conv2d(cin, cout, 3)
            "c1_w": 0.1 * jax.random.normal(k_c1, (3, 3, cin, cout), jnp.float32),
            "c1_b": 0.01 * jnp.arange(cout, dtype=jnp.float32),
            # Block.conv2 = Conv2d(cout, cout, 3)
            "c2_w": 0.1 * jax.random.normal(k_c2, (3, 3, cout, cout), jnp.float32),
            "c2_b": 0.01 * jnp.arange(cout, dtype=jnp.float32),
        })
    return params


if __name__ == "__main__":
    key = jax.random.PRNGKey(0)
    chs = (32, 16, 8)            # scaled-down version of (1024,512,256,128,64)
    B = 2

    k_x, k_e0, k_e1, k_p = jax.random.split(key, 4)

    # PyTorch-style NCHW inputs, converted to NHWC for the kernels.
    x_nchw = jax.random.normal(k_x, (B, chs[0], 8, 8), jnp.float32)
    enc0_nchw = jax.random.normal(k_e0, (B, chs[1], 20, 20), jnp.float32)
    enc1_nchw = jax.random.normal(k_e1, (B, chs[2], 28, 28), jnp.float32)

    to_nhwc = lambda t: jnp.transpose(t, (0, 2, 3, 1))
    x = to_nhwc(x_nchw)
    enc_feats = [to_nhwc(enc0_nchw), to_nhwc(enc1_nchw)]

    params = init_decoder_params(k_p, chs)

    out = jax.block_until_ready(decoder_forward(x, enc_feats, params))

    # Numerical sanity check against a pure-JAX reference of the same
    # (bf16 operands, f32 accumulate) math.
    ref = jax.block_until_ready(decoder_forward_ref(x, enc_feats, params))
    assert out.shape == ref.shape, (out.shape, ref.shape)
    max_err = float(jnp.max(jnp.abs(out - ref)))
    assert jnp.allclose(out, ref, rtol=2e-2, atol=2e-2), max_err

    print("KERNEL_OK")
</pallas_src>

<mosaic_0001>
module attributes {stable_mosaic.version = 11 : i64} {
  func.func @_upconv2x2_kernel(%arg0: i32, %arg1: i32, %arg2: memref<1x4x8x32xf32, #tpu.memory_space<vmem>>, %arg3: memref<2x2x32x16xbf16, #tpu.memory_space<vmem>>, %arg4: memref<1x16xf32, #tpu.memory_space<vmem>>, %arg5: memref<1x8x256xf32, #tpu.memory_space<vmem>>) attributes {dimension_semantics = [#tpu.dimension_semantics<parallel>, #tpu.dimension_semantics<parallel>], iteration_bounds = array<i64: 2, 2>, scalar_prefetch = 0 : i64, scratch_operands = 0 : i64, tpu.core_type = #tpu.core_type<tc>, window_params = [{transform_indices = @transform_0, window_bounds = array<i64: 1, 4, 8, 32>}, {pipeline_mode = #tpu.pipeline_mode<synchronous>, transform_indices = @transform_1, window_bounds = array<i64: 2, 2, 32, 16>}, {pipeline_mode = #tpu.pipeline_mode<synchronous>, transform_indices = @transform_2, window_bounds = array<i64: 1, 16>}, {transform_indices = @transform_3, window_bounds = array<i64: 1, 8, 256>}]} {
    %c0 = arith.constant 0 : index
    %c0_0 = arith.constant 0 : index
    %c0_1 = arith.constant 0 : index
    %c0_2 = arith.constant 0 : index
    %0 = vector.load %arg2[%c0, %c0_0, %c0_1, %c0_2] : memref<1x4x8x32xf32, #tpu.memory_space<vmem>>, vector<1x4x8x32xf32>
    %1 = vector.shape_cast %0 : vector<1x4x8x32xf32> to vector<4x8x32xf32>
    %2 = vector.shape_cast %1 : vector<4x8x32xf32> to vector<32x32xf32>
    %3 = arith.truncf %2 : vector<32x32xf32> to vector<32x32xbf16>
    %c0_3 = arith.constant 0 : index
    %c0_4 = arith.constant 0 : index
    %4 = vector.load %arg4[%c0_3, %c0_4] : memref<1x16xf32, #tpu.memory_space<vmem>>, vector<1x16xf32>
    %c0_5 = arith.constant 0 : index
    %c0_6 = arith.constant 0 : index
    %c0_7 = arith.constant 0 : index
    %c0_8 = arith.constant 0 : index
    %5 = vector.load %arg3[%c0_5, %c0_6, %c0_7, %c0_8] : memref<2x2x32x16xbf16, #tpu.memory_space<vmem>>, vector<1x1x32x16xbf16>
    %6 = vector.shape_cast %5 : vector<1x1x32x16xbf16> to vector<32x16xbf16>
    %cst = arith.constant dense<0.000000e+00> : vector<32x16xf32>
    %7 = tpu.matmul %3, %6, %cst {dimension_numbers = #tpu.dot_dimension_numbers<[1], [0], [0], [1], [0, 0, 1, 1], [], []>} : vector<32x32xbf16>, vector<32x16xbf16>, vector<32x16xf32> -> vector<32x16xf32>
    %8 = vector.broadcast %4 : vector<1x16xf32> to vector<32x16xf32>
    %9 = arith.addf %7, %8 : vector<32x16xf32>
    %10 = vector.shape_cast %9 : vector<32x16xf32> to vector<4x8x16xf32>
    %c0_9 = arith.constant 0 : index
    %c1 = arith.constant 1 : index
    %c0_10 = arith.constant 0 : index
    %c0_11 = arith.constant 0 : index
    %11 = vector.load %arg3[%c0_9, %c1, %c0_10, %c0_11] : memref<2x2x32x16xbf16, #tpu.memory_space<vmem>>, vector<1x1x32x16xbf16>
    %12 = vector.shape_cast %11 : vector<1x1x32x16xbf16> to vector<32x16xbf16>
    %cst_12 = arith.constant dense<0.000000e+00> : vector<32x16xf32>
    %13 = tpu.matmul %3, %12, %cst_12 {dimension_numbers = #tpu.dot_dimension_numbers<[1], [0], [0], [1], [0, 0, 1, 1], [], []>} : vector<32x32xbf16>, vector<32x16xbf16>, vector<32x16xf32> -> vector<32x16xf32>
    %14 = vector.broadcast %4 : vector<1x16xf32> to vector<32x16xf32>
    %15 = arith.addf %13, %14 : vector<32x16xf32>
    %16 = vector.shape_cast %15 : vector<32x16xf32> to vector<4x8x16xf32>
    %17 = tpu.concatenate %10, %16 in 2 : vector<4x8x16xf32>, vector<4x8x16xf32> -> vector<4x8x32xf32>
    %18 = vector.shape_cast %17 : vector<4x8x32xf32> to vector<4x256xf32>
    %c1_13 = arith.constant 1 : index
    %c0_14 = arith.constant 0 : index
    %c0_15 = arith.constant 0 : index
    %c0_16 = arith.constant 0 : index
    %19 = vector.load %arg3[%c1_13, %c0_14, %c0_15, %c0_16] : memref<2x2x32x16xbf16, #tpu.memory_space<vmem>>, vector<1x1x32x16xbf16>
    %20 = vector.shape_cast %19 : vector<1x1x32x16xbf16> to vector<32x16xbf16>
    %cst_17 = arith.constant dense<0.000000e+00> : vector<32x16xf32>
    %21 = tpu.matmul %3, %20, %cst_17 {dimension_numbers = #tpu.dot_dimension_numbers<[1], [0], [0], [1], [0, 0, 1, 1], [], []>} : vector<32x32xbf16>, vector<32x16xbf16>, vector<32x16xf32> -> vector<32x16xf32>
    %22 = vector.broadcast %4 : vector<1x16xf32> to vector<32x16xf32>
    %23 = arith.addf %21, %22 : vector<32x16xf32>
    %24 = vector.shape_cast %23 : vector<32x16xf32> to vector<4x8x16xf32>
    %c1_18 = arith.constant 1 : index
    %c1_19 = arith.constant 1 : index
    %c0_20 = arith.constant 0 : index
    %c0_21 = arith.constant 0 : index
    %25 = vector.load %arg3[%c1_18, %c1_19, %c0_20, %c0_21] : memref<2x2x32x16xbf16, #tpu.memory_space<vmem>>, vector<1x1x32x16xbf16>
    %26 = vector.shape_cast %25 : vector<1x1x32x16xbf16> to vector<32x16xbf16>
    %cst_22 = arith.constant dense<0.000000e+00> : vector<32x16xf32>
    %27 = tpu.matmul %3, %26, %cst_22 {dimension_numbers = #tpu.dot_dimension_numbers<[1], [0], [0], [1], [0, 0, 1, 1], [], []>} : vector<32x32xbf16>, vector<32x16xbf16>, vector<32x16xf32> -> vector<32x16xf32>
    %28 = vector.broadcast %4 : vector<1x16xf32> to vector<32x16xf32>
    %29 = arith.addf %27, %28 : vector<32x16xf32>
    %30 = vector.shape_cast %29 : vector<32x16xf32> to vector<4x8x16xf32>
    %31 = tpu.concatenate %24, %30 in 2 : vector<4x8x16xf32>, vector<4x8x16xf32> -> vector<4x8x32xf32>
    %32 = vector.shape_cast %31 : vector<4x8x32xf32> to vector<4x256xf32>
    %33 = vector.shape_cast %18 : vector<4x256xf32> to vector<4x1x256xf32>
    %34 = vector.shape_cast %32 : vector<4x256xf32> to vector<4x1x256xf32>
    %35 = tpu.concatenate %33, %34 in 1 : vector<4x1x256xf32>, vector<4x1x256xf32> -> vector<4x2x256xf32>
    %36 = vector.shape_cast %35 : vector<4x2x256xf32> to vector<8x256xf32>
    %c0_23 = arith.constant 0 : index
    %c0_24 = arith.constant 0 : index
    %c0_25 = arith.constant 0 : index
    %37 = vector.load %arg5[%c0_23, %c0_24, %c0_25] : memref<1x8x256xf32, #tpu.memory_space<vmem>>, vector<1x8x256xf32>
    %38 = vector.shape_cast %37 : vector<1x8x256xf32> to vector<8x256xf32>
    %39 = vector.shape_cast %36 : vector<8x256xf32> to vector<1x8x256xf32>
    tpu.vector_store %arg5[%c0_23, %c0_24, %c0_25], %39 {strides = array<i32>} : memref<1x8x256xf32, #tpu.memory_space<vmem>>, vector<1x8x256xf32>,
    return
  }
  func.func @transform_0(%arg0: i32, %arg1: i32) -> (i32, i32, i32, i32) {
    %c0_i32 = arith.constant 0 : i32
    %c0_i32_0 = arith.constant 0 : i32
    %c0_i32_1 = arith.constant 0 : i32
    return %arg0, %arg1, %c0_i32, %c0_i32_0 : i32, i32, i32, i32
  }
  func.func @transform_1(%arg0: i32, %arg1: i32) -> (i32, i32, i32, i32) {
    %c0_i32 = arith.constant 0 : i32
    %c0_i32_0 = arith.constant 0 : i32
    %c0_i32_1 = arith.constant 0 : i32
    %c0_i32_2 = arith.constant 0 : i32
    %c0_i32_3 = arith.constant 0 : i32
    return %c0_i32, %c0_i32_0, %c0_i32_1, %c0_i32_2 : i32, i32, i32, i32
  }
  func.func @transform_2(%arg0: i32, %arg1: i32) -> (i32, i32) {
    %c0_i32 = arith.constant 0 : i32
    %c0_i32_0 = arith.constant 0 : i32
    %c0_i32_1 = arith.constant 0 : i32
    return %c0_i32, %c0_i32_0 : i32, i32
  }
  func.func @transform_3(%arg0: i32, %arg1: i32) -> (i32, i32, i32) {
    %c0_i32 = arith.constant 0 : i32
    %c0_i32_0 = arith.constant 0 : i32
    return %arg0, %arg1, %c0_i32 : i32, i32, i32
  }
}

</mosaic_0001>

<llo_original>
// kernel: tpu_custom_call.1
$region0: #{tpu_custom_call.1}
  #allocation0 [shape = 'u32[]', space=smem, size = 0x4, offset = 0x4, fixed_abs, tag = 'smem constant byte address 0x4 - core index']
  #allocation1 [shape = 'u32[144,128]{1,0:T(1,128)}', space=vmem, size = 0x12000, scoped, tag = 'internal scratch']
  %s0 = inlined_call_operand.hbm [shape: f32[2,8,8,32], index: 0, kind: input, shape index: {}]
  %s1 = inlined_call_operand.vmem [shape: bf16[2,2,32,16], index: 1, kind: input, shape index: {}]
  %s2 = inlined_call_operand.vmem [shape: f32[1,16], index: 2, kind: input, shape index: {}]
  %s3 = inlined_call_operand.hbm [shape: f32[2,16,256], index: 3, kind: output, shape index: {}]
  %s4 = sld [smem:[#allocation0]]
  $region49: #{tpu_custom_call.1} parent=0
    _
  %s6 = ssub.s32 1, %s4
  %s7 = scalar_select 0, %s6, %s4
  $region1: #{tpu_custom_call.1} parent=0
    #allocation2 [shape = 'u8[32768]{0}', space=vmem, size = 0x8000, scoped, tag = 'input window, operand 0']
    #allocation3 [shape = 's32[2]{0}', space=sflag, size = 0x8, scoped, tag = 'scoped memory for tpu_custom_call.1']
    #allocation4 [shape = 's32[2]{0}', space=sflag, size = 0x8, scoped, tag = 'scoped memory for tpu_custom_call.1']
    #allocation5 [shape = 'u8[16384]{0}', space=vmem, size = 0x4000, scoped, tag = 'output window, operand 0']
    %8 = vsyncpa [#allocation3], 0
    %s9 = scalar_lea.sflag [#allocation3], 1
    %10 = vsyncpa %s9, 0
    %11 = vsyncpa [#allocation4], 0
    %s12 = scalar_lea.sflag [#allocation4], 1
    %13 = vsyncpa %s12, 0
    loop: start=0, step=1, limit=6
    $region2: #{tpu_custom_call.1} parent=1 // loop_pre_header
      _
    $region3: #{tpu_custom_call.1} parent=1 // loop_header
      %s15 = sphi 0, %s19
      %p16 = scmp.ge.s32.totalorder %s15, 6
      %s22 = sphi 0, %s34
      %s23 = sphi 0, %s30
      %s24 = sphi 0, %s22
      %s25 = sphi 0, %s23
      %s26 = sphi 0, %s24
      %s27 = sphi 0, %s25
      %s39 = sphi 0, %s41
      %s42 = sphi 0, %s39
      %s43 = sphi 0, %s42
      %s59 = sphi 0, %s43
      %s63 = sphi 0, %s63
      %s65 = sphi 0, %s63
      %s66 = sphi 0, %s65
      %s80 = sphi 0, %s66
      %s84 = sphi 0, %s84
      %s86 = sphi 0, %s84
      %s87 = sphi 0, %s86
      %s101 = sphi 0, %s87
      %s109 = sphi 0, %s111
      %s112 = sphi 0, %s109
      %s113 = sphi 0, %s112
      %s129 = sphi 0, %s113
    $region4: #{tpu_custom_call.1} parent=1 // loop_header_branch
      %18 = sbr.rel (%p16) target = $region8
    $region5: #{tpu_custom_call.1} parent=1 // loop_body
      %s20 = ssub.s32 %s15, 1
      %s21 = ssub.s32 %s15, 2
      %s28 = sadd.s32 1, %s23
      %p29 = scmp.ge.s32.totalorder %s28, 2
      %s30 = scalar_select %p29, 0, %s28
      %s31 = sadd.s32 1, %s22
      %s32 = scalar_select %p29, %s31, %s22
      %p33 = scmp.ge.s32.totalorder %s32, 2
      %s34 = scalar_select %p33, 0, %s32
      %s35 = ssub.s32 %s22, %s34
      %s36 = ssub.s32 %s23, %s30
      %s37 = sor.u32 %s35, %s36
      %p38 = scmp.eq.s32.totalorder %s37, 0
      %s40 = sadd.s32 %s39, 1
      %s41 = scalar_select %p38, %s39, %s40
      %p44 = pneg %p38
      %p45 = scmp.eq.s32.totalorder %s15, 3
      %p46 = por %p44, %p45
      %p47 = scmp.ne.s32.totalorder %s39, %s42
      %p48 = scmp.eq.s32.totalorder %s15, 0
      %p49 = por %p47, %p48
      %p50 = scmp.ne.s32.totalorder %s39, %s42
      %p51 = scmp.eq.s32.totalorder %s20, 3
      %p52 = por %p50, %p51
      %p53 = scmp.ne.s32.totalorder %s42, %s43
      %p54 = scmp.eq.s32.totalorder %s20, 0
      %p55 = por %p53, %p54
      %p56 = scmp.ne.s32.totalorder %s42, %s43
      %p57 = scmp.eq.s32.totalorder %s21, 3
      %p58 = por %p56, %p57
      %p60 = scmp.ne.s32.totalorder %s43, %s59
      %p61 = scmp.eq.s32.totalorder %s21, 0
      %p62 = por %p60, %p61
      %s64 = sadd.s32 %s63, 1
      %p67 = scmp.eq.s32.totalorder %s15, 3
      %p68 = scmp.ne.s32.totalorder %s63, %s65
      %p69 = scmp.eq.s32.totalorder %s15, 0
      %p70 = por %p68, %p69
      %p71 = scmp.ne.s32.totalorder %s63, %s65
      %p72 = scmp.eq.s32.totalorder %s20, 3
      %p73 = por %p71, %p72
      %p74 = scmp.ne.s32.totalorder %s65, %s66
      %p75 = scmp.eq.s32.totalorder %s20, 0
      %p76 = por %p74, %p75
      %p77 = scmp.ne.s32.totalorder %s65, %s66
      %p78 = scmp.eq.s32.totalorder %s21, 3
      %p79 = por %p77, %p78
      %p81 = scmp.ne.s32.totalorder %s66, %s80
      %p82 = scmp.eq.s32.totalorder %s21, 0
      %p83 = por %p81, %p82
      %s85 = sadd.s32 %s84, 1
      %p88 = scmp.eq.s32.totalorder %s15, 3
      %p89 = scmp.ne.s32.totalorder %s84, %s86
      %p90 = scmp.eq.s32.totalorder %s15, 0
      %p91 = por %p89, %p90
      %p92 = scmp.ne.s32.totalorder %s84, %s86
      %p93 = scmp.eq.s32.totalorder %s20, 3
      %p94 = por %p92, %p93
      %p95 = scmp.ne.s32.totalorder %s86, %s87
      %p96 = scmp.eq.s32.totalorder %s20, 0
      %p97 = por %p95, %p96
      %p98 = scmp.ne.s32.totalorder %s86, %s87
      %p99 = scmp.eq.s32.totalorder %s21, 3
      %p100 = por %p98, %p99
      %p102 = scmp.ne.s32.totalorder %s87, %s101
      %p103 = scmp.eq.s32.totalorder %s21, 0
      %p104 = por %p102, %p103
      %s105 = ssub.s32 %s22, %s34
      %s106 = ssub.s32 %s23, %s30
      %s107 = sor.u32 %s105, %s106
      %p108 = scmp.eq.s32.totalorder %s107, 0
      %s110 = sadd.s32 %s109, 1
      %s111 = scalar_select %p108, %s109, %s110
      %p114 = pneg %p108
      %p115 = scmp.eq.s32.totalorder %s15, 3
      %p116 = por %p114, %p115
      %p117 = scmp.ne.s32.totalorder %s109, %s112
      %p118 = scmp.eq.s32.totalorder %s15, 0
      %p119 = por %p117, %p118
      %p120 = scmp.ne.s32.totalorder %s109, %s112
      %p121 = scmp.eq.s32.totalorder %s20, 3
      %p122 = por %p120, %p121
      %p123 = scmp.ne.s32.totalorder %s112, %s113
      %p124 = scmp.eq.s32.totalorder %s20, 0
      %p125 = por %p123, %p124
      %p126 = scmp.ne.s32.totalorder %s112, %s113
      %p127 = scmp.eq.s32.totalorder %s21, 3
      %p128 = por %p126, %p127
      %p130 = scmp.ne.s32.totalorder %s113, %s129
      %p131 = scmp.eq.s32.totalorder %s21, 0
      %p132 = por %p130, %p131
      %p133 = scmp.le.s32.totalorder 1, %s15
      %p134 = scmp.lt.s32.totalorder %s15, 5
      %p135 = pnand %p133, %p134
      %p136 = pneg %p135
      // Predicated region
      $region9: #{tpu_custom_call.1} parent=5 // pred_check
        _
      $region10: #{tpu_custom_call.1} parent=5 // pred_check_branch
        %138 = sbr.rel (%p135) target = $region12
      $region11: #{tpu_custom_call.1} parent=5 // pred_region
        %s139 = ssub.s32 %s15, 1
        // Predicated region
        $region13: #{tpu_custom_call.1} parent=11 // pred_check
          %p140 = pneg %p76
        $region14: #{tpu_custom_call.1} parent=11 // pred_check_branch
          %142 = sbr.rel (%p140) target = $region16
        $region15: #{tpu_custom_call.1} parent=11 // pred_region
          _
        $region16: #{tpu_custom_call.1} parent=11 // pred_fallthru
          _
        // Predicated region
        $region17: #{tpu_custom_call.1} parent=11 // pred_check
          %p143 = pneg %p97
        $region18: #{tpu_custom_call.1} parent=11 // pred_check_branch
          %145 = sbr.rel (%p143) target = $region20
        $region19: #{tpu_custom_call.1} parent=11 // pred_region
          _
        $region20: #{tpu_custom_call.1} parent=11 // pred_fallthru
          _
      $region12: #{tpu_custom_call.1} parent=5 // pred_fallthru
        _
      %p146 = scmp.lt.s32.totalorder %s15, 4
      // Predicated region
      $region21: #{tpu_custom_call.1} parent=5 // pred_check
        %p147 = pneg %p146
      $region22: #{tpu_custom_call.1} parent=5 // pred_check_branch
        %149 = sbr.rel (%p147) target = $region24
      $region23: #{tpu_custom_call.1} parent=5 // pred_region
        // Predicated region
        $region25: #{tpu_custom_call.1} parent=23 // pred_check
          %p150 = pneg %p49
        $region26: #{tpu_custom_call.1} parent=23 // pred_check_branch
          %152 = sbr.rel (%p150) target = $region28
        $region27: #{tpu_custom_call.1} parent=23 // pred_region
          %s153 = sand.u32 %s39, 1
          %s154 = scalar_lea.sflag [#allocation3], %s153
          %s155 = sand.u32 %s39, 1
          %s156 = smul.addr %s155, 32
          %s157 = scalar_lea.vmem [#allocation2], %s156
          %s158 = smul.u32 4, %s23
          %s160 = ssub.s32 512, 512
          %161 = vsyncadd %s154, %s160
          %s162 = smul.addr %s22, 8
          %s163 = sadd.s32 %s158, %s162
          %s164 = smul.addr %s163, 128
          %s165 = scalar_lea.hbm %s0, %s164
          %s166 = sshll.u32 %s157, 4
          %s167 = int_to_ptr.vmem [resolvable:$true] %s166
          %172 = dma.hbm_to_vmem [thread:$0]  %s165, 512, %s167, %s154, 128, 128, 8
        $region28: #{tpu_custom_call.1} parent=23 // pred_fallthru
          _
      $region24: #{tpu_custom_call.1} parent=5 // pred_fallthru
        _
      %p173 = scmp.le.s32.totalorder 1, %s15
      %p174 = scmp.lt.s32.totalorder %s15, 5
      %p175 = pnand %p173, %p174
      %p176 = pneg %p175
      // Predicated region
      $region29: #{tpu_custom_call.1} parent=5 // pred_check
        _
      $region30: #{tpu_custom_call.1} parent=5 // pred_check_branch
        %178 = sbr.rel (%p175) target = $region32
      $region31: #{tpu_custom_call.1} parent=5 // pred_region
        %s179 = ssub.s32 %s15, 1
        %s180 = sand.u32 %s42, 1
        %s181 = scalar_lea.sflag [#allocation3], %s180
        %s182 = sand.u32 %s42, 1
        %s183 = smul.addr %s182, 32
        %s184 = scalar_lea.vmem [#allocation2], %s183
        // Predicated region
        $region33: #{tpu_custom_call.1} parent=31 // pred_check
          %p185 = pneg %p55
        $region34: #{tpu_custom_call.1} parent=31 // pred_check_branch
          %187 = sbr.rel (%p185) target = $region36
        $region35: #{tpu_custom_call.1} parent=31 // pred_region
          %188 = dma.done %s181, 512
        $region36: #{tpu_custom_call.1} parent=31 // pred_fallthru
          _
        %s189 = sand.u32 %s42, 1
        %s190 = scalar_lea.sflag [#allocation3], %s189
        %s191 = sand.u32 %s42, 1
        %s192 = smul.addr %s191, 32
        %s193 = scalar_lea.vmem [#allocation2], %s192
        %p194 = pneg %p55
        %p195 = pneg %p52
        %p196 = pneg %p76
        %p197 = pneg %p73
        %p198 = pneg %p97
        %p199 = pneg %p94
        %p200 = pneg %p125
        %p201 = pneg %p122
        %s202 = sand.u32 %s112, 1
        %s203 = scalar_lea.sflag [#allocation4], %s202
        %s204 = sand.u32 %s112, 1
        %s205 = smul.addr %s204, 16
        %s206 = scalar_lea.vmem [#allocation5], %s205
        %s207 = smul.u32 4, %s25
        %v209 = vld [vmem:[%s184] sm:$0xff]
        %v210 = vld [vmem:[%s184 + $0x8] sm:$0xff]
        %v211 = vld [vmem:[%s184 + $0x10] sm:$0xff]
        %v212 = vld [vmem:[%s184 + $0x18] sm:$0xff]
        %v213 = vpack.c.bf16 %v210, %v209
        %v214 = vpack.c.bf16 %v212, %v211
        %v215 = vld [vmem:[%s2] sm:$0x1]
        %v216 = vld [vmem:[%s1] sm:$0xf]
        %v217 = vld [vmem:[%s1 + $0x4] sm:$0xf]
        %v218 = vld [vmem:[%s1 + $0x8] sm:$0xf]
        %v219 = vld [vmem:[%s1 + $0xc] sm:$0xf]
        %v221 = vlaneseq
        %v222 = vshrl.u32 %v221, 7
        %v223 = vsub.s32 0, %v222
        %v224 = vrot.slane %v215, %v223
        %v230 = vunpack.c.l.b16 %v216
        %v231 = vunpack.c.l.b16 %v217
        %v232 = vunpack.c.l.b16 %v218
        %v233 = vunpack.c.l.b16 %v219
        %v234 = vpack.c.b16 %v231, %v230
        %v235 = vpack.c.b16 %v233, %v232
        %vm238 = vcmask 261120
        %v240 = vsel %vm238, %v213, 0
        %v243 = vsel %vm238, %v214, 0
        %245 = vmatprep.subr.bf16.mxu0 0
        %246 = vmatpush1.bf16.msra.mxu0 0
        %247 = vmatprep.subr.bf16.mxu0 0
        %248 = vmatpush1.bf16.msra.mxu0 0
        %249 = vmatprep.subr.bf16.mxu0 0
        %250 = vmatpush1.bf16.msra.mxu0 0
        %251 = vmatprep.subr.bf16.mxu0 0
        %252 = vmatpush1.bf16.msra.mxu0 0
        %253 = vmatprep.subr.bf16.mxu0 0
        %254 = vmatpush1.bf16.msra.mxu0 0
        %255 = vmatprep.subr.bf16.mxu0 0
        %256 = vmatpush1.bf16.msra.mxu0 0
        %257 = vmatprep.subr.bf16.mxu0 0
        %258 = vmatpush1.bf16.msra.mxu0 %v235
        %259 = vmatprep.subr.bf16.mxu0 0
        %260 = vmatpush1.bf16.msra.mxu0 %v234
        %261 = vmatprep.subr.bf16.mxu0 0
        %262 = vmatpush2.bf16.msra.mxu0 0
        %263 = vmatprep.subr.bf16.mxu0 0
        %264 = vmatpush2.bf16.msra.mxu0 0
        %265 = vmatprep.subr.bf16.mxu0 0
        %266 = vmatpush2.bf16.msra.mxu0 0
        %267 = vmatprep.subr.bf16.mxu0 0
        %268 = vmatpush2.bf16.msra.mxu0 0
        %269 = vmatprep.subr.bf16.mxu0 0
        %270 = vmatpush2.bf16.msra.mxu0 0
        %271 = vmatprep.subr.bf16.mxu0 0
        %272 = vmatpush2.bf16.msra.mxu0 0
        %273 = vmatprep.subr.bf16.mxu0 0
        %274 = vmatpush2.bf16.msra.mxu0 0
        %275 = vmatprep.subr.bf16.mxu0 0
        %276 = vmatpush2.bf16.msra.mxu0 0
        %277 = vmatprep.mubr.bf16.mxu0 0
        %278 = vmatmul.mubr.bf16.gmra.mxu0 %v240
        %v279 = vpop.f32.mrf.mxu0
        %v280 = vadd.f32 %v224, %v279
        %v281 = vpop.f32.mrf.mxu0
        %v282 = vpop.f32.mrf.mxu0
        %v283 = vadd.f32 %v224, %v282
        %v284 = vpop.f32.mrf.mxu0
        %285 = vmatprep.mubr.bf16.mxu0 0
        %286 = vmatmul.mubr.bf16.gmra.mxu0 %v243
        %v287 = vpop.f32.mrf.mxu0
        %v288 = vadd.f32 %v224, %v287
        %v289 = vpop.f32.mrf.mxu0
        %v290 = vpop.f32.mrf.mxu0
        %v291 = vadd.f32 %v224, %v290
        %v292 = vpop.f32.mrf.mxu0
        %293 = vdwg.mxu0
        %s294 = scalar_lea.vmem %s1, 16
        %v295 = vld [vmem:[%s294] sm:$0xf]
        %v296 = vld [vmem:[%s294 + $0x4] sm:$0xf]
        %v297 = vld [vmem:[%s294 + $0x8] sm:$0xf]
        %v298 = vld [vmem:[%s294 + $0xc] sm:$0xf]
        %v303 = vunpack.c.l.b16 %v295
        %v304 = vunpack.c.l.b16 %v296
        %v305 = vunpack.c.l.b16 %v297
        %v306 = vunpack.c.l.b16 %v298
        %v307 = vpack.c.b16 %v304, %v303
        %v308 = vpack.c.b16 %v306, %v305
        %311 = vmatprep.subr.bf16.mxu0 0
        %312 = vmatpush1.bf16.msra.mxu0 0
        %313 = vmatprep.subr.bf16.mxu0 0
        %314 = vmatpush1.bf16.msra.mxu0 0
        %315 = vmatprep.subr.bf16.mxu0 0
        %316 = vmatpush1.bf16.msra.mxu0 0
        %317 = vmatprep.subr.bf16.mxu0 0
        %318 = vmatpush1.bf16.msra.mxu0 0
        %319 = vmatprep.subr.bf16.mxu0 0
        %320 = vmatpush1.bf16.msra.mxu0 0
        %321 = vmatprep.subr.bf16.mxu0 0
        %322 = vmatpush1.bf16.msra.mxu0 0
        %323 = vmatprep.subr.bf16.mxu0 0
        %324 = vmatpush1.bf16.msra.mxu0 %v308
        %325 = vmatprep.subr.bf16.mxu0 0
        %326 = vmatpush1.bf16.msra.mxu0 %v307
        %327 = vmatprep.subr.bf16.mxu0 0
        %328 = vmatpush2.bf16.msra.mxu0 0
        %329 = vmatprep.subr.bf16.mxu0 0
        %330 = vmatpush2.bf16.msra.mxu0 0
        %331 = vmatprep.subr.bf16.mxu0 0
        %332 = vmatpush2.bf16.msra.mxu0 0
        %333 = vmatprep.subr.bf16.mxu0 0
        %334 = vmatpush2.bf16.msra.mxu0 0
        %335 = vmatprep.subr.bf16.mxu0 0
        %336 = vmatpush2.bf16.msra.mxu0 0
        %337 = vmatprep.subr.bf16.mxu0 0
        %338 = vmatpush2.bf16.msra.mxu0 0
        %339 = vmatprep.subr.bf16.mxu0 0
        %340 = vmatpush2.bf16.msra.mxu0 0
        %341 = vmatprep.subr.bf16.mxu0 0
        %342 = vmatpush2.bf16.msra.mxu0 0
        %343 = vmatprep.mubr.bf16.mxu0 0
        %344 = vmatmul.mubr.bf16.gmra.mxu0 %v240
        %v345 = vpop.f32.mrf.mxu0
        %v346 = vadd.f32 %v224, %v345
        %v347 = vpop.f32.mrf.mxu0
        %v348 = vpop.f32.mrf.mxu0
        %v349 = vadd.f32 %v224, %v348
        %v350 = vpop.f32.mrf.mxu0
        %351 = vmatprep.mubr.bf16.mxu0 0
        %352 = vmatmul.mubr.bf16.gmra.mxu0 %v243
        %v353 = vpop.f32.mrf.mxu0
        %v354 = vadd.f32 %v224, %v353
        %v355 = vpop.f32.mrf.mxu0
        %v356 = vpop.f32.mrf.mxu0
        %v357 = vadd.f32 %v224, %v356
        %v358 = vpop.f32.mrf.mxu0
        %359 = vdwg.mxu0
        %364 = vrot.lane.b32.xlu0 %v346, 16
        %v365 = vpop.permute.xlu0 %364
        %366 = vrot.lane.b32.xlu0 %v349, 16
        %v367 = vpop.permute.xlu0 %366
        %368 = vrot.lane.b32.xlu0 %v354, 16
        %v369 = vpop.permute.xlu0 %368
        %370 = vrot.lane.b32.xlu0 %v357, 16
        %v371 = vpop.permute.xlu0 %370
        %vm376 = vcmask 130048
        %v377 = vsel %vm376, %v280, %v365
        %v378 = vsel %vm376, %v283, %v367
        %v379 = vsel %vm376, %v288, %v369
        %v380 = vsel %vm376, %v291, %v371
        %s381 = scalar_lea.vmem %s1, 32
        %v382 = vld [vmem:[%s381] sm:$0xf]
        %v383 = vld [vmem:[%s381 + $0x4] sm:$0xf]
        %v384 = vld [vmem:[%s381 + $0x8] sm:$0xf]
        %v385 = vld [vmem:[%s381 + $0xc] sm:$0xf]
        %v390 = vunpack.c.l.b16 %v382
        %v391 = vunpack.c.l.b16 %v383
        %v392 = vunpack.c.l.b16 %v384
        %v393 = vunpack.c.l.b16 %v385
        %v394 = vpack.c.b16 %v391, %v390
        %v395 = vpack.c.b16 %v393, %v392
        %398 = vmatprep.subr.bf16.mxu0 0
        %399 = vmatpush1.bf16.msra.mxu0 0
        %400 = vmatprep.subr.bf16.mxu0 0
        %401 = vmatpush1.bf16.msra.mxu0 0
        %402 = vmatprep.subr.bf16.mxu0 0
        %403 = vmatpush1.bf16.msra.mxu0 0
        %404 = vmatprep.subr.bf16.mxu0 0
        %405 = vmatpush1.bf16.msra.mxu0 0
        %406 = vmatprep.subr.bf16.mxu0 0
        %407 = vmatpush1.bf16.msra.mxu0 0
        %408 = vmatprep.subr.bf16.mxu0 0
        %409 = vmatpush1.bf16.msra.mxu0 0
        %410 = vmatprep.subr.bf16.mxu0 0
        %411 = vmatpush1.bf16.msra.mxu0 %v395
        %412 = vmatprep.subr.bf16.mxu0 0
        %413 = vmatpush1.bf16.msra.mxu0 %v394
        %414 = vmatprep.subr.bf16.mxu0 0
        %415 = vmatpush2.bf16.msra.mxu0 0
        %416 = vmatprep.subr.bf16.mxu0 0
        %417 = vmatpush2.bf16.msra.mxu0 0
        %418 = vmatprep.subr.bf16.mxu0 0
        %419 = vmatpush2.bf16.msra.mxu0 0
        %420 = vmatprep.subr.bf16.mxu0 0
        %421 = vmatpush2.bf16.msra.mxu0 0
        %422 = vmatprep.subr.bf16.mxu0 0
        %423 = vmatpush2.bf16.msra.mxu0 0
        %424 = vmatprep.subr.bf16.mxu0 0
        %425 = vmatpush2.bf16.msra.mxu0 0
        %426 = vmatprep.subr.bf16.mxu0 0
        %427 = vmatpush2.bf16.msra.mxu0 0
        %428 = vmatprep.subr.bf16.mxu0 0
        %429 = vmatpush2.bf16.msra.mxu0 0
        %430 = vmatprep.mubr.bf16.mxu0 0
        %431 = vmatmul.mubr.bf16.gmra.mxu0 %v240
        %v432 = vpop.f32.mrf.mxu0
        %v433 = vadd.f32 %v224, %v432
        %v434 = vpop.f32.mrf.mxu0
        %v435 = vpop.f32.mrf.mxu0
        %v436 = vadd.f32 %v224, %v435
        %v437 = vpop.f32.mrf.mxu0
        %438 = vmatprep.mubr.bf16.mxu0 0
        %439 = vmatmul.mubr.bf16.gmra.mxu0 %v243
        %v440 = vpop.f32.mrf.mxu0
        %v441 = vadd.f32 %v224, %v440
        %v442 = vpop.f32.mrf.mxu0
        %v443 = vpop.f32.mrf.mxu0
        %v444 = vadd.f32 %v224, %v443
        %v445 = vpop.f32.mrf.mxu0
        %446 = vdwg.mxu0
        %s447 = scalar_lea.vmem %s1, 48
        %v448 = vld [vmem:[%s447] sm:$0xf]
        %v449 = vld [vmem:[%s447 + $0x4] sm:$0xf]
        %v450 = vld [vmem:[%s447 + $0x8] sm:$0xf]
        %v451 = vld [vmem:[%s447 + $0xc] sm:$0xf]
        %v456 = vunpack.c.l.b16 %v448
        %v457 = vunpack.c.l.b16 %v449
        %v458 = vunpack.c.l.b16 %v450
        %v459 = vunpack.c.l.b16 %v451
        %v460 = vpack.c.b16 %v457, %v456
        %v461 = vpack.c.b16 %v459, %v458
        %464 = vmatprep.subr.bf16.mxu0 0
        %465 = vmatpush1.bf16.msra.mxu0 0
        %466 = vmatprep.subr.bf16.mxu0 0
        %467 = vmatpush1.bf16.msra.mxu0 0
        %468 = vmatprep.subr.bf16.mxu0 0
        %469 = vmatpush1.bf16.msra.mxu0 0
        %470 = vmatprep.subr.bf16.mxu0 0
        %471 = vmatpush1.bf16.msra.mxu0 0
        %472 = vmatprep.subr.bf16.mxu0 0
        %473 = vmatpush1.bf16.msra.mxu0 0
        %474 = vmatprep.subr.bf16.mxu0 0
        %475 = vmatpush1.bf16.msra.mxu0 0
        %476 = vmatprep.subr.bf16.mxu0 0
        %477 = vmatpush1.bf16.msra.mxu0 %v461
        %478 = vmatprep.subr.bf16.mxu0 0
        %479 = vmatpush1.bf16.msra.mxu0 %v460
        %480 = vmatprep.subr.bf16.mxu0 0
        %481 = vmatpush2.bf16.msra.mxu0 0
        %482 = vmatprep.subr.bf16.mxu0 0
        %483 = vmatpush2.bf16.msra.mxu0 0
        %484 = vmatprep.subr.bf16.mxu0 0
        %485 = vmatpush2.bf16.msra.mxu0 0
        %486 = vmatprep.subr.bf16.mxu0 0
        %487 = vmatpush2.bf16.msra.mxu0 0
        %488 = vmatprep.subr.bf16.mxu0 0
        %489 = vmatpush2.bf16.msra.mxu0 0
        %490 = vmatprep.subr.bf16.mxu0 0
        %491 = vmatpush2.bf16.msra.mxu0 0
        %492 = vmatprep.subr.bf16.mxu0 0
        %493 = vmatpush2.bf16.msra.mxu0 0
        %494 = vmatprep.subr.bf16.mxu0 0
        %495 = vmatpush2.bf16.msra.mxu0 0
        %496 = vmatprep.mubr.bf16.mxu0 0
        %497 = vmatmul.mubr.bf16.gmra.mxu0 %v240
        %v498 = vpop.f32.mrf.mxu0
        %v499 = vadd.f32 %v224, %v498
        %v500 = vpop.f32.mrf.mxu0
        %v501 = vpop.f32.mrf.mxu0
        %v502 = vadd.f32 %v224, %v501
        %v503 = vpop.f32.mrf.mxu0
        %504 = vmatprep.mubr.bf16.mxu0 0
        %505 = vmatmul.mubr.bf16.gmra.mxu0 %v243
        %v506 = vpop.f32.mrf.mxu0
        %v507 = vadd.f32 %v224, %v506
        %v508 = vpop.f32.mrf.mxu0
        %v509 = vpop.f32.mrf.mxu0
        %v510 = vadd.f32 %v224, %v509
        %v511 = vpop.f32.mrf.mxu0
        %512 = vdwg.mxu0
        %517 = vrot.lane.b32.xlu0 %v499, 16
        %v518 = vpop.permute.xlu0 %517
        %519 = vrot.lane.b32.xlu0 %v502, 16
        %v520 = vpop.permute.xlu0 %519
        %521 = vrot.lane.b32.xlu0 %v507, 16
        %v522 = vpop.permute.xlu0 %521
        %523 = vrot.lane.b32.xlu0 %v510, 16
        %v524 = vpop.permute.xlu0 %523
        %v529 = vsel %vm376, %v433, %v518
        %v530 = vsel %vm376, %v436, %v520
        %v531 = vsel %vm376, %v441, %v522
        %v532 = vsel %vm376, %v444, %v524
        %v533 = vcombine.high %v377, 0.0
        %v535 = vunpack.c.l.s4 1983009808
        %v536 = vunpack.c.0.s8 %v535
        %v537 = vlaneseq
        %v538 = vshrl.u32 %v537, 7
        %v539 = vsub.s32 %v536, %v538
        %v540 = vrot.slane %v377, %v539
        %v542 = vunpack.c.l.s4 1983009808
        %v543 = vunpack.c.0.s8 %v542
        %v544 = vlaneseq
        %v545 = vshrl.u32 %v544, 7
        %v546 = vsub.s32 %v543, %v545
        %v547 = vrot.slane %v533, %v546
        %v548 = vcombine.high %v540, 0.0
        %v550 = vunpack.c.l.s4 1934713408
        %v551 = vunpack.c.0.s8 %v550
        %v552 = vlaneseq
        %v553 = vshrl.u32 %v552, 7
        %v554 = vsub.s32 %v551, %v553
        %v555 = vrot.slane %v540, %v554
        %v557 = vunpack.c.l.s4 1934713408
        %v558 = vunpack.c.0.s8 %v557
        %v559 = vlaneseq
        %v560 = vshrl.u32 %v559, 7
        %v561 = vsub.s32 %v558, %v560
        %v562 = vrot.slane %v548, %v561
        %v563 = vcombine.high %v547, 0.0
        %v565 = vunpack.c.l.s4 1934713408
        %v566 = vunpack.c.0.s8 %v565
        %v567 = vlaneseq
        %v568 = vshrl.u32 %v567, 7
        %v569 = vsub.s32 %v566, %v568
        %v570 = vrot.slane %v547, %v569
        %v572 = vunpack.c.l.s4 1934713408
        %v573 = vunpack.c.0.s8 %v572
        %v574 = vlaneseq
        %v575 = vshrl.u32 %v574, 7
        %v576 = vsub.s32 %v573, %v575
        %v577 = vrot.slane %v563, %v576
        %v578 = vcombine.high %v555, 0.0
        %v579 = vcombine.high %v562, 0.0
        %v580 = vcombine.high %v570, 0.0
        %v581 = vcombine.high %v577, 0.0
        %v582 = vcombine.high %v378, 0.0
        %v584 = vunpack.c.l.s4 1983009808
        %v585 = vunpack.c.0.s8 %v584
        %v586 = vlaneseq
        %v587 = vshrl.u32 %v586, 7
        %v588 = vsub.s32 %v585, %v587
        %v589 = vrot.slane %v378, %v588
        %v591 = vunpack.c.l.s4 1983009808
        %v592 = vunpack.c.0.s8 %v591
        %v593 = vlaneseq
        %v594 = vshrl.u32 %v593, 7
        %v595 = vsub.s32 %v592, %v594
        %v596 = vrot.slane %v582, %v595
        %v597 = vcombine.high %v589, 0.0
        %v599 = vunpack.c.l.s4 1934713408
        %v600 = vunpack.c.0.s8 %v599
        %v601 = vlaneseq
        %v602 = vshrl.u32 %v601, 7
        %v603 = vsub.s32 %v600, %v602
        %v604 = vrot.slane %v589, %v603
        %v606 = vunpack.c.l.s4 1934713408
        %v607 = vunpack.c.0.s8 %v606
        %v608 = vlaneseq
        %v609 = vshrl.u32 %v608, 7
        %v610 = vsub.s32 %v607, %v609
        %v611 = vrot.slane %v597, %v610
        %v612 = vcombine.high %v596, 0.0
        %v614 = vunpack.c.l.s4 1934713408
        %v615 = vunpack.c.0.s8 %v614
        %v616 = vlaneseq
        %v617 = vshrl.u32 %v616, 7
        %v618 = vsub.s32 %v615, %v617
        %v619 = vrot.slane %v596, %v618
        %v621 = vunpack.c.l.s4 1934713408
        %v622 = vunpack.c.0.s8 %v621
        %v623 = vlaneseq
        %v624 = vshrl.u32 %v623, 7
        %v625 = vsub.s32 %v622, %v624
        %v626 = vrot.slane %v612, %v625
        %v627 = vcombine.high %v604, 0.0
        %v628 = vcombine.high %v611, 0.0
        %v629 = vcombine.high %v619, 0.0
        %v630 = vcombine.high %v626, 0.0
        %v631 = vcombine.high %v379, 0.0
        %v633 = vunpack.c.l.s4 1983009808
        %v634 = vunpack.c.0.s8 %v633
        %v635 = vlaneseq
        %v636 = vshrl.u32 %v635, 7
        %v637 = vsub.s32 %v634, %v636
        %v638 = vrot.slane %v379, %v637
        %v640 = vunpack.c.l.s4 1983009808
        %v641 = vunpack.c.0.s8 %v640
        %v642 = vlaneseq
        %v643 = vshrl.u32 %v642, 7
        %v644 = vsub.s32 %v641, %v643
        %v645 = vrot.slane %v631, %v644
        %v646 = vcombine.high %v638, 0.0
        %v648 = vunpack.c.l.s4 1934713408
        %v649 = vunpack.c.0.s8 %v648
        %v650 = vlaneseq
        %v651 = vshrl.u32 %v650, 7
        %v652 = vsub.s32 %v649, %v651
        %v653 = vrot.slane %v638, %v652
        %v655 = vunpack.c.l.s4 1934713408
        %v656 = vunpack.c.0.s8 %v655
        %v657 = vlaneseq
        %v658 = vshrl.u32 %v657, 7
        %v659 = vsub.s32 %v656, %v658
        %v660 = vrot.slane %v646, %v659
        %v661 = vcombine.high %v645, 0.0
        %v663 = vunpack.c.l.s4 1934713408
        %v664 = vunpack.c.0.s8 %v663
        %v665 = vlaneseq
        %v666 = vshrl.u32 %v665, 7
        %v667 = vsub.s32 %v664, %v666
        %v668 = vrot.slane %v645, %v667
        %v670 = vunpack.c.l.s4 1934713408
        %v671 = vunpack.c.0.s8 %v670
        %v672 = vlaneseq
        %v673 = vshrl.u32 %v672, 7
        %v674 = vsub.s32 %v671, %v673
        %v675 = vrot.slane %v661, %v674
        %v676 = vcombine.high %v653, 0.0
        %v677 = vcombine.high %v660, 0.0
        %v678 = vcombine.high %v668, 0.0
        %v679 = vcombine.high %v675, 0.0
        %v680 = vcombine.high %v380, 0.0
        %v682 = vunpack.c.l.s4 1983009808
        %v683 = vunpack.c.0.s8 %v682
        %v684 = vlaneseq
        %v685 = vshrl.u32 %v684, 7
        %v686 = vsub.s32 %v683, %v685
        %v687 = vrot.slane %v380, %v686
        %v689 = vunpack.c.l.s4 1983009808
        %v690 = vunpack.c.0.s8 %v689
        %v691 = vlaneseq
        %v692 = vshrl.u32 %v691, 7
        %v693 = vsub.s32 %v690, %v692
        %v694 = vrot.slane %v680, %v693
        %v695 = vcombine.high %v687, 0.0
        %v697 = vunpack.c.l.s4 1934713408
        %v698 = vunpack.c.0.s8 %v697
        %v699 = vlaneseq
        %v700 = vshrl.u32 %v699, 7
        %v701 = vsub.s32 %v698, %v700
        %v702 = vrot.slane %v687, %v701
        %v704 = vunpack.c.l.s4 1934713408
        %v705 = vunpack.c.0.s8 %v704
        %v706 = vlaneseq
        %v707 = vshrl.u32 %v706, 7
        %v708 = vsub.s32 %v705, %v707
        %v709 = vrot.slane %v695, %v708
        %v710 = vcombine.high %v694, 0.0
        %v712 = vunpack.c.l.s4 1934713408
        %v713 = vunpack.c.0.s8 %v712
        %v714 = vlaneseq
        %v715 = vshrl.u32 %v714, 7
        %v716 = vsub.s32 %v713, %v715
        %v717 = vrot.slane %v694, %v716
        %v719 = vunpack.c.l.s4 1934713408
        %v720 = vunpack.c.0.s8 %v719
        %v721 = vlaneseq
        %v722 = vshrl.u32 %v721, 7
        %v723 = vsub.s32 %v720, %v722
        %v724 = vrot.slane %v710, %v723
        %v725 = vcombine.high %v702, 0.0
        %v726 = vcombine.high %v709, 0.0
        %v727 = vcombine.high %v717, 0.0
        %v728 = vcombine.high %v724, 0.0
        %733 = vrot.lane.b32.xlu0 %v578, 32
        %v734 = vpop.permute.xlu0 %733
        %735 = vrot.lane.b32.xlu0 %v627, 32
        %v736 = vpop.permute.xlu0 %735
        %737 = vrot.lane.b32.xlu0 %v676, 32
        %v738 = vpop.permute.xlu0 %737
        %739 = vrot.lane.b32.xlu0 %v725, 32
        %v740 = vpop.permute.xlu0 %739
        %749 = vrot.lane.b32.xlu0 %v562, 64
        %v750 = vpop.permute.xlu0 %749
        %751 = vrot.lane.b32.xlu0 %v611, 64
        %v752 = vpop.permute.xlu0 %751
        %753 = vrot.lane.b32.xlu0 %v660, 64
        %v754 = vpop.permute.xlu0 %753
        %755 = vrot.lane.b32.xlu0 %v709, 64
        %v756 = vpop.permute.xlu0 %755
        %765 = vrot.lane.b32.xlu0 %v579, 96
        %v766 = vpop.permute.xlu0 %765
        %767 = vrot.lane.b32.xlu0 %v628, 96
        %v768 = vpop.permute.xlu0 %767
        %769 = vrot.lane.b32.xlu0 %v677, 96
        %v770 = vpop.permute.xlu0 %769
        %771 = vrot.lane.b32.xlu0 %v726, 96
        %v772 = vpop.permute.xlu0 %771
        %781 = vrot.lane.b32.xlu0 %v580, 32
        %v782 = vpop.permute.xlu0 %781
        %783 = vrot.lane.b32.xlu0 %v629, 32
        %v784 = vpop.permute.xlu0 %783
        %785 = vrot.lane.b32.xlu0 %v678, 32
        %v786 = vpop.permute.xlu0 %785
        %787 = vrot.lane.b32.xlu0 %v727, 32
        %v788 = vpop.permute.xlu0 %787
        %797 = vrot.lane.b32.xlu0 %v577, 64
        %v798 = vpop.permute.xlu0 %797
        %799 = vrot.lane.b32.xlu0 %v626, 64
        %v800 = vpop.permute.xlu0 %799
        %801 = vrot.lane.b32.xlu0 %v675, 64
        %v802 = vpop.permute.xlu0 %801
        %803 = vrot.lane.b32.xlu0 %v724, 64
        %v804 = vpop.permute.xlu0 %803
        %813 = vrot.lane.b32.xlu0 %v581, 96
        %v814 = vpop.permute.xlu0 %813
        %815 = vrot.lane.b32.xlu0 %v630, 96
        %v816 = vpop.permute.xlu0 %815
        %817 = vrot.lane.b32.xlu0 %v679, 96
        %v818 = vpop.permute.xlu0 %817
        %819 = vrot.lane.b32.xlu0 %v728, 96
        %v820 = vpop.permute.xlu0 %819
        %v825 = vsel %vm238, %v555, %v734
        %v826 = vsel %vm238, %v604, %v736
        %v827 = vsel %vm238, %v653, %v738
        %v828 = vsel %vm238, %v702, %v740
        %vm829 = vcmask 523264
        %v830 = vsel %vm829, %v825, %v750
        %v831 = vsel %vm829, %v826, %v752
        %v832 = vsel %vm829, %v827, %v754
        %v833 = vsel %vm829, %v828, %v756
        %vm834 = vcmask 785408
        %v835 = vsel %vm834, %v830, %v766
        %v836 = vsel %vm834, %v831, %v768
        %v837 = vsel %vm834, %v832, %v770
        %v838 = vsel %vm834, %v833, %v772
        %v839 = vsel %vm238, %v570, %v782
        %v840 = vsel %vm238, %v619, %v784
        %v841 = vsel %vm238, %v668, %v786
        %v842 = vsel %vm238, %v717, %v788
        %v843 = vsel %vm829, %v839, %v798
        %v844 = vsel %vm829, %v840, %v800
        %v845 = vsel %vm829, %v841, %v802
        %v846 = vsel %vm829, %v842, %v804
        %v847 = vsel %vm834, %v843, %v814
        %v848 = vsel %vm834, %v844, %v816
        %v849 = vsel %vm834, %v845, %v818
        %v850 = vsel %vm834, %v846, %v820
        %v851 = vcombine.high %v529, 0.0
        %v853 = vunpack.c.l.s4 1983009808
        %v854 = vunpack.c.0.s8 %v853
        %v855 = vlaneseq
        %v856 = vshrl.u32 %v855, 7
        %v857 = vsub.s32 %v854, %v856
        %v858 = vrot.slane %v529, %v857
        %v860 = vunpack.c.l.s4 1983009808
        %v861 = vunpack.c.0.s8 %v860
        %v862 = vlaneseq
        %v863 = vshrl.u32 %v862, 7
        %v864 = vsub.s32 %v861, %v863
        %v865 = vrot.slane %v851, %v864
        %v866 = vcombine.high %v858, 0.0
        %v868 = vunpack.c.l.s4 1934713408
        %v869 = vunpack.c.0.s8 %v868
        %v870 = vlaneseq
        %v871 = vshrl.u32 %v870, 7
        %v872 = vsub.s32 %v869, %v871
        %v873 = vrot.slane %v858, %v872
        %v875 = vunpack.c.l.s4 1934713408
        %v876 = vunpack.c.0.s8 %v875
        %v877 = vlaneseq
        %v878 = vshrl.u32 %v877, 7
        %v879 = vsub.s32 %v876, %v878
        %v880 = vrot.slane %v866, %v879
        %v881 = vcombine.high %v865, 0.0
        %v883 = vunpack.c.l.s4 1934713408
        %v884 = vunpack.c.0.s8 %v883
        %v885 = vlaneseq
        %v886 = vshrl.u32 %v885, 7
        %v887 = vsub.s32 %v884, %v886
        %v888 = vrot.slane %v865, %v887
        %v890 = vunpack.c.l.s4 1934713408
        %v891 = vunpack.c.0.s8 %v890
        %v892 = vlaneseq
        %v893 = vshrl.u32 %v892, 7
        %v894 = vsub.s32 %v891, %v893
        %v895 = vrot.slane %v881, %v894
        %v896 = vcombine.high %v873, 0.0
        %v897 = vcombine.high %v880, 0.0
        %v898 = vcombine.high %v888, 0.0
        %v899 = vcombine.high %v895, 0.0
        %v900 = vcombine.high %v530, 0.0
        %v902 = vunpack.c.l.s4 1983009808
        %v903 = vunpack.c.0.s8 %v902
        %v904 = vlaneseq
        %v905 = vshrl.u32 %v904, 7
        %v906 = vsub.s32 %v903, %v905
        %v907 = vrot.slane %v530, %v906
        %v909 = vunpack.c.l.s4 1983009808
        %v910 = vunpack.c.0.s8 %v909
        %v911 = vlaneseq
        %v912 = vshrl.u32 %v911, 7
        %v913 = vsub.s32 %v910, %v912
        %v914 = vrot.slane %v900, %v913
        %v915 = vcombine.high %v907, 0.0
        %v917 = vunpack.c.l.s4 1934713408
        %v918 = vunpack.c.0.s8 %v917
        %v919 = vlaneseq
        %v920 = vshrl.u32 %v919, 7
        %v921 = vsub.s32 %v918, %v920
        %v922 = vrot.slane %v907, %v921
        %v924 = vunpack.c.l.s4 1934713408
        %v925 = vunpack.c.0.s8 %v924
        %v926 = vlaneseq
        %v927 = vshrl.u32 %v926, 7
        %v928 = vsub.s32 %v925, %v927
        %v929 = vrot.slane %v915, %v928
        %v930 = vcombine.high %v914, 0.0
        %v932 = vunpack.c.l.s4 1934713408
        %v933 = vunpack.c.0.s8 %v932
        %v934 = vlaneseq
        %v935 = vshrl.u32 %v934, 7
        %v936 = vsub.s32 %v933, %v935
        %v937 = vrot.slane %v914, %v936
        %v939 = vunpack.c.l.s4 1934713408
        %v940 = vunpack.c.0.s8 %v939
        %v941 = vlaneseq
        %v942 = vshrl.u32 %v941, 7
        %v943 = vsub.s32 %v940, %v942
        %v944 = vrot.slane %v930, %v943
        %v945 = vcombine.high %v922, 0.0
        %v946 = vcombine.high %v929, 0.0
        %v947 = vcombine.high %v937, 0.0
        %v948 = vcombine.high %v944, 0.0
        %v949 = vcombine.high %v531, 0.0
        %v951 = vunpack.c.l.s4 1983009808
        %v952 = vunpack.c.0.s8 %v951
        %v953 = vlaneseq
        %v954 = vshrl.u32 %v953, 7
        %v955 = vsub.s32 %v952, %v954
        %v956 = vrot.slane %v531, %v955
        %v958 = vunpack.c.l.s4 1983009808
        %v959 = vunpack.c.0.s8 %v958
        %v960 = vlaneseq
        %v961 = vshrl.u32 %v960, 7
        %v962 = vsub.s32 %v959, %v961
        %v963 = vrot.slane %v949, %v962
        %v964 = vcombine.high %v956, 0.0
        %v966 = vunpack.c.l.s4 1934713408
        %v967 = vunpack.c.0.s8 %v966
        %v968 = vlaneseq
        %v969 = vshrl.u32 %v968, 7
        %v970 = vsub.s32 %v967, %v969
        %v971 = vrot.slane %v956, %v970
        %v973 = vunpack.c.l.s4 1934713408
        %v974 = vunpack.c.0.s8 %v973
        %v975 = vlaneseq
        %v976 = vshrl.u32 %v975, 7
        %v977 = vsub.s32 %v974, %v976
        %v978 = vrot.slane %v964, %v977
        %v979 = vcombine.high %v963, 0.0
        %v981 = vunpack.c.l.s4 1934713408
        %v982 = vunpack.c.0.s8 %v981
        %v983 = vlaneseq
        %v984 = vshrl.u32 %v983, 7
        %v985 = vsub.s32 %v982, %v984
        %v986 = vrot.slane %v963, %v985
        %v988 = vunpack.c.l.s4 1934713408
        %v989 = vunpack.c.0.s8 %v988
        %v990 = vlaneseq
        %v991 = vshrl.u32 %v990, 7
        %v992 = vsub.s32 %v989, %v991
        %v993 = vrot.slane %v979, %v992
        %v994 = vcombine.high %v971, 0.0
        %v995 = vcombine.high %v978, 0.0
        %v996 = vcombine.high %v986, 0.0
        %v997 = vcombine.high %v993, 0.0
        %v998 = vcombine.high %v532, 0.0
        %v1000 = vunpack.c.l.s4 1983009808
        %v1001 = vunpack.c.0.s8 %v1000
        %v1002 = vlaneseq
        %v1003 = vshrl.u32 %v1002, 7
        %v1004 = vsub.s32 %v1001, %v1003
        %v1005 = vrot.slane %v532, %v1004
        %v1007 = vunpack.c.l.s4 1983009808
        %v1008 = vunpack.c.0.s8 %v1007
        %v1009 = vlaneseq
        %v1010 = vshrl.u32 %v1009, 7
        %v1011 = vsub.s32 %v1008, %v1010
        %v1012 = vrot.slane %v998, %v1011
        %v1013 = vcombine.high %v1005, 0.0
        %v1015 = vunpack.c.l.s4 1934713408
        %v1016 = vunpack.c.0.s8 %v1015
        %v1017 = vlaneseq
        %v1018 = vshrl.u32 %v1017, 7
        %v1019 = vsub.s32 %v1016, %v1018
        %v1020 = vrot.slane %v1005, %v1019
        %v1022 = vunpack.c.l.s4 1934713408
        %v1023 = vunpack.c.0.s8 %v1022
        %v1024 = vlaneseq
        %v1025 = vshrl.u32 %v1024, 7
        %v1026 = vsub.s32 %v1023, %v1025
        %v1027 = vrot.slane %v1013, %v1026
        %v1028 = vcombine.high %v1012, 0.0
        %v1030 = vunpack.c.l.s4 1934713408
        %v1031 = vunpack.c.0.s8 %v1030
        %v1032 = vlaneseq
        %v1033 = vshrl.u32 %v1032, 7
        %v1034 = vsub.s32 %v1031, %v1033
        %v1035 = vrot.slane %v1012, %v1034
        %v1037 = vunpack.c.l.s4 1934713408
        %v1038 = vunpack.c.0.s8 %v1037
        %v1039 = vlaneseq
        %v1040 = vshrl.u32 %v1039, 7
        %v1041 = vsub.s32 %v1038, %v1040
        %v1042 = vrot.slane %v1028, %v1041
        %v1043 = vcombine.high %v1020, 0.0
        %v1044 = vcombine.high %v1027, 0.0
        %v1045 = vcombine.high %v1035, 0.0
        %v1046 = vcombine.high %v1042, 0.0
        %1051 = vrot.lane.b32.xlu0 %v896, 32
        %v1052 = vpop.permute.xlu0 %1051
        %1053 = vrot.lane.b32.xlu0 %v945, 32
        %v1054 = vpop.permute.xlu0 %1053
        %1055 = vrot.lane.b32.xlu0 %v994, 32
        %v1056 = vpop.permute.xlu0 %1055
        %1057 = vrot.lane.b32.xlu0 %v1043, 32
        %v1058 = vpop.permute.xlu0 %1057
        %1067 = vrot.lane.b32.xlu0 %v880, 64
        %v1068 = vpop.permute.xlu0 %1067
        %1069 = vrot.lane.b32.xlu0 %v929, 64
        %v1070 = vpop.permute.xlu0 %1069
        %1071 = vrot.lane.b32.xlu0 %v978, 64
        %v1072 = vpop.permute.xlu0 %1071
        %1073 = vrot.lane.b32.xlu0 %v1027, 64
        %v1074 = vpop.permute.xlu0 %1073
        %1083 = vrot.lane.b32.xlu0 %v897, 96
        %v1084 = vpop.permute.xlu0 %1083
        %1085 = vrot.lane.b32.xlu0 %v946, 96
        %v1086 = vpop.permute.xlu0 %1085
        %1087 = vrot.lane.b32.xlu0 %v995, 96
        %v1088 = vpop.permute.xlu0 %1087
        %1089 = vrot.lane.b32.xlu0 %v1044, 96
        %v1090 = vpop.permute.xlu0 %1089
        %1099 = vrot.lane.b32.xlu0 %v898, 32
        %v1100 = vpop.permute.xlu0 %1099
        %1101 = vrot.lane.b32.xlu0 %v947, 32
        %v1102 = vpop.permute.xlu0 %1101
        %1103 = vrot.lane.b32.xlu0 %v996, 32
        %v1104 = vpop.permute.xlu0 %1103
        %1105 = vrot.lane.b32.xlu0 %v1045, 32
        %v1106 = vpop.permute.xlu0 %1105
        %1115 = vrot.lane.b32.xlu0 %v895, 64
        %v1116 = vpop.permute.xlu0 %1115
        %1117 = vrot.lane.b32.xlu0 %v944, 64
        %v1118 = vpop.permute.xlu0 %1117
        %1119 = vrot.lane.b32.xlu0 %v993, 64
        %v1120 = vpop.permute.xlu0 %1119
        %1121 = vrot.lane.b32.xlu0 %v1042, 64
        %v1122 = vpop.permute.xlu0 %1121
        %1131 = vrot.lane.b32.xlu0 %v899, 96
        %v1132 = vpop.permute.xlu0 %1131
        %1133 = vrot.lane.b32.xlu0 %v948, 96
        %v1134 = vpop.permute.xlu0 %1133
        %1135 = vrot.lane.b32.xlu0 %v997, 96
        %v1136 = vpop.permute.xlu0 %1135
        %1137 = vrot.lane.b32.xlu0 %v1046, 96
        %v1138 = vpop.permute.xlu0 %1137
        %v1143 = vsel %vm238, %v873, %v1052
        %v1144 = vsel %vm238, %v922, %v1054
        %v1145 = vsel %vm238, %v971, %v1056
        %v1146 = vsel %vm238, %v1020, %v1058
        %v1147 = vsel %vm829, %v1143, %v1068
        %v1148 = vsel %vm829, %v1144, %v1070
        %v1149 = vsel %vm829, %v1145, %v1072
        %v1150 = vsel %vm829, %v1146, %v1074
        %v1151 = vsel %vm834, %v1147, %v1084
        %v1152 = vsel %vm834, %v1148, %v1086
        %v1153 = vsel %vm834, %v1149, %v1088
        %v1154 = vsel %vm834, %v1150, %v1090
        %v1155 = vsel %vm238, %v888, %v1100
        %v1156 = vsel %vm238, %v937, %v1102
        %v1157 = vsel %vm238, %v986, %v1104
        %v1158 = vsel %vm238, %v1035, %v1106
        %v1159 = vsel %vm829, %v1155, %v1116
        %v1160 = vsel %vm829, %v1156, %v1118
        %v1161 = vsel %vm829, %v1157, %v1120
        %v1162 = vsel %vm829, %v1158, %v1122
        %v1163 = vsel %vm834, %v1159, %v1132
        %v1164 = vsel %vm834, %v1160, %v1134
        %v1165 = vsel %vm834, %v1161, %v1136
        %v1166 = vsel %vm834, %v1162, %v1138
        %v1175 = vrot.slane %v1151, 7
        %v1176 = vrot.slane %v1163, 7
        %v1177 = vrot.slane %v1152, 7
        %v1178 = vrot.slane %v1164, 7
        %v1179 = vrot.slane %v1153, 7
        %v1180 = vrot.slane %v1165, 7
        %v1181 = vrot.slane %v1154, 7
        %v1182 = vrot.slane %v1166, 7
        %vm1191 = vcmask 1040384
        %v1192 = vsel %vm1191, %v835, %v1175
        %v1193 = vsel %vm1191, %v847, %v1176
        %v1194 = vsel %vm1191, %v836, %v1177
        %v1195 = vsel %vm1191, %v848, %v1178
        %v1196 = vsel %vm1191, %v837, %v1179
        %v1197 = vsel %vm1191, %v849, %v1180
        %v1198 = vsel %vm1191, %v838, %v1181
        %v1199 = vsel %vm1191, %v850, %v1182
        %v1208 = vcombine.low %v1192, %v1193
        %v1210 = vunpack.c.l.s4 1983009808
        %v1211 = vunpack.c.0.s8 %v1210
        %v1212 = vlaneseq
        %v1213 = vshrl.u32 %v1212, 7
        %v1214 = vsub.s32 %v1211, %v1213
        %v1215 = vrot.slane %v1208, %v1214
        %v1216 = vcombine.low %v1194, %v1195
        %v1218 = vunpack.c.l.s4 1983009808
        %v1219 = vunpack.c.0.s8 %v1218
        %v1220 = vlaneseq
        %v1221 = vshrl.u32 %v1220, 7
        %v1222 = vsub.s32 %v1219, %v1221
        %v1223 = vrot.slane %v1216, %v1222
        %v1224 = vcombine.low %v1196, %v1197
        %v1226 = vunpack.c.l.s4 1983009808
        %v1227 = vunpack.c.0.s8 %v1226
        %v1228 = vlaneseq
        %v1229 = vshrl.u32 %v1228, 7
        %v1230 = vsub.s32 %v1227, %v1229
        %v1231 = vrot.slane %v1224, %v1230
        %v1232 = vcombine.low %v1198, %v1199
        %v1234 = vunpack.c.l.s4 1983009808
        %v1235 = vunpack.c.0.s8 %v1234
        %v1236 = vlaneseq
        %v1237 = vshrl.u32 %v1236, 7
        %v1238 = vsub.s32 %v1235, %v1237
        %v1239 = vrot.slane %v1232, %v1238
        %v1240 = vcombine.low %v1215, %v1223
        %v1241 = vcombine.low %v1231, %v1239
        %v1243 = vunpack.c.l.s4 1983009808
        %v1244 = vunpack.c.0.s8 %v1243
        %v1245 = vlaneseq
        %v1246 = vshrl.u32 %v1245, 7
        %v1247 = vsub.s32 %v1244, %v1246
        %v1248 = vrot.slane %v1240, %v1247
        %v1250 = vunpack.c.l.s4 1983009808
        %v1251 = vunpack.c.0.s8 %v1250
        %v1252 = vlaneseq
        %v1253 = vshrl.u32 %v1252, 7
        %v1254 = vsub.s32 %v1251, %v1253
        %v1255 = vrot.slane %v1241, %v1254
        %v1256 = vcombine.low %v1248, %v1255
        %v1257 = vcombine.high %v1248, %v1255
        %1260 = vst [vmem:[%s206] sm:$0xff] %v1256
        %1261 = vst [vmem:[%s206 + $0x8] sm:$0xff] %v1257
        %s1262 = sand.u32 %s112, 1
        %s1263 = scalar_lea.sflag [#allocation4], %s1262
        %s1264 = sand.u32 %s112, 1
        %s1265 = smul.addr %s1264, 16
        %s1266 = scalar_lea.vmem [#allocation5], %s1265
        // Predicated region
        $region37: #{tpu_custom_call.1} parent=31 // pred_check
          %p1267 = pneg %p122
        $region38: #{tpu_custom_call.1} parent=31 // pred_check_branch
          %1269 = sbr.rel (%p1267) target = $region40
        $region39: #{tpu_custom_call.1} parent=31 // pred_region
          %s1271 = ssub.s32 256, 256
          %1272 = vsyncadd %s1263, %s1271
          %s1273 = smul.addr %s25, 2
          %s1274 = smul.addr %s24, 4
          %s1275 = sadd.s32 %s1273, %s1274
          %s1276 = smul.addr %s1275, 128
          %s1277 = scalar_lea.hbm %s3, %s1276
          %s1279 = sshll.u32 %s1266, 4
          %s1280 = int_to_ptr.vmem [resolvable:$true] %s1279
          %1282 = dma.vmem_to_hbm [thread:$0]  %s1280, 256, %s1277, %s1263
        $region40: #{tpu_custom_call.1} parent=31 // pred_fallthru
          _
      $region32: #{tpu_custom_call.1} parent=5 // pred_fallthru
        _
      %p1283 = scmp.le.s32.totalorder 2, %s15
      // Predicated region
      $region41: #{tpu_custom_call.1} parent=5 // pred_check
        %p1284 = pneg %p1283
      $region42: #{tpu_custom_call.1} parent=5 // pred_check_branch
        %1286 = sbr.rel (%p1284) target = $region44
      $region43: #{tpu_custom_call.1} parent=5 // pred_region
        %s1287 = ssub.s32 %s15, 2
        // Predicated region
        $region45: #{tpu_custom_call.1} parent=43 // pred_check
          %p1288 = pneg %p128
        $region46: #{tpu_custom_call.1} parent=43 // pred_check_branch
          %1290 = sbr.rel (%p1288) target = $region48
        $region47: #{tpu_custom_call.1} parent=43 // pred_region
          %s1291 = sand.u32 %s113, 1
          %s1292 = scalar_lea.sflag [#allocation4], %s1291
          %s1293 = sand.u32 %s113, 1
          %s1294 = smul.addr %s1293, 16
          %s1295 = scalar_lea.vmem [#allocation5], %s1294
          %1296 = dma.done %s1292, 256
        $region48: #{tpu_custom_call.1} parent=43 // pred_fallthru
          _
      $region44: #{tpu_custom_call.1} parent=5 // pred_fallthru
        _
    $region6: #{tpu_custom_call.1} parent=1 // loop_footer
      %s19 = sadd.s32 1, %s15
    $region7: #{tpu_custom_call.1} parent=1 // loop_footer_branch
      %14 = sbr.rel target = $region3
    $region8: #{tpu_custom_call.1} parent=1 // loop_exit
      _
    %1297 = vsyncpa [#allocation3], 1
    %s1298 = scalar_lea.sflag [#allocation3], 1
    %1299 = vsyncpa %s1298, 1
    %1300 = vsyncpa [#allocation4], 1
    %s1301 = scalar_lea.sflag [#allocation4], 1
    %1302 = vsyncpa %s1301, 1

</llo_original>
